<compile_context>
chip_gen: v6e
topology: v6e:2x2x1
jax: 0.10.0
libtpu: 0.0.40
codegen_flags: <defaults>
</compile_context>

<pallas_src>
import functools

import jax
import jax.numpy as jnp
from jax.experimental import pallas as pl
from jax.experimental.pallas import tpu as pltpu

FEAT = 43          # raw input features (42 board cells + turn)
H1 = 128
H2 = 64
OUT = 3            # raw output classes
TB_MAX = 2048      # max batch tile rows
TARGET_TILES = 8   # aim for >= 8 grid steps (>= 4 per TC on 2-TC chips)


def _round_up(n, m):
    return ((n + m - 1) // m) * m


def _mlp_kernel(x_ref, w1_ref, b1_ref, w2_ref, b2_ref, w3_ref, b3_ref, o_ref):
    # x arrives as (TB, 43) f32 straight from HBM; cast in-register for the
    # MXU's native bf16 path.  All accumulation is f32.
    x = x_ref[...].astype(jnp.bfloat16)                                  # (TB, 43)
    h1 = jnp.dot(x, w1_ref[...], preferred_element_type=jnp.float32) + b1_ref[...]
    h1 = jnp.maximum(h1, 0.0).astype(jnp.bfloat16)                       # (TB, 128)
    h2 = jnp.dot(h1, w2_ref[...], preferred_element_type=jnp.float32) + b2_ref[...]
    h2 = jnp.maximum(h2, 0.0).astype(jnp.bfloat16)                       # (TB, 64)
    o_ref[...] = (
        jnp.dot(h2, w3_ref[...], preferred_element_type=jnp.float32) + b3_ref[...]
    )                                                                    # (TB, 3) f32


def _prepare_params(params):
    """Cast weights to bf16 and normalize bias shapes (fused under jit)."""
    w1 = params["w1"].astype(jnp.bfloat16)                 # (43, 128)
    w2 = params["w2"].astype(jnp.bfloat16)                 # (128, 64)
    w3 = params["w3"].astype(jnp.bfloat16)                 # (64, 3)
    b1 = params["b1"].reshape(1, H1).astype(jnp.float32)
    b2 = params["b2"].reshape(1, H2).astype(jnp.float32)
    b3 = params["b3"].reshape(1, OUT).astype(jnp.float32)
    return w1, b1, w2, b2, w3, b3


@functools.partial(jax.jit, static_argnames=("tb",))
def connect4_outcome_predictor(x, params, tb=None):
    """x: (B, 43) float32.  params: dict of pre-transposed (in, out) weights."""
    w1, b1, w2, b2, w3, b3 = _prepare_params(params)
    B = x.shape[0]

    if tb is None:
        # Enough tiles to keep both TensorCores busy on 2-TC parts and keep the
        # pipeline overlapped; rows a multiple of 8, capped at TB_MAX.
        TB = min(TB_MAX, max(8, _round_up(pl.cdiv(B, TARGET_TILES), 8)))
    else:
        TB = max(8, _round_up(tb, 8))
    if B <= TB:
        TB = B  # single full-extent block (block dim == array dim is legal)
    n_tiles = pl.cdiv(B, TB)  # ragged last block: OOB reads unused, OOB writes dropped

    out = pl.pallas_call(
        _mlp_kernel,
        out_shape=jax.ShapeDtypeStruct((B, OUT), jnp.float32),
        grid=(n_tiles,),
        in_specs=[
            pl.BlockSpec((TB, FEAT), lambda i: (i, 0)),    # x: tiled over batch
            pl.BlockSpec((FEAT, H1), lambda i: (0, 0)),    # weights stay VMEM-resident
            pl.BlockSpec((1, H1), lambda i: (0, 0)),
            pl.BlockSpec((H1, H2), lambda i: (0, 0)),
            pl.BlockSpec((1, H2), lambda i: (0, 0)),
            pl.BlockSpec((H2, OUT), lambda i: (0, 0)),
            pl.BlockSpec((1, OUT), lambda i: (0, 0)),
        ],
        out_specs=pl.BlockSpec((TB, OUT), lambda i: (i, 0)),
        compiler_params=pltpu.CompilerParams(
            dimension_semantics=("parallel",),
            vmem_limit_bytes=32 << 20,   # headroom for v5e's 16 MiB default
        ),
    )(x.astype(jnp.float32), w1, b1, w2, b2, w3, b3)

    return out


def init_params(key):
    """Deterministic init matching nn.Linear shapes (uniform +-1/sqrt(fan_in))."""
    def linear(key, fan_in, fan_out):
        kw, kb = jax.random.split(key)
        bound = 1.0 / jnp.sqrt(jnp.float32(fan_in))
        # stored transposed: (in, out) so the kernel computes x @ W
        w = jax.random.uniform(kw, (fan_in, fan_out), jnp.float32, -bound, bound)
        b = jax.random.uniform(kb, (1, fan_out), jnp.float32, -bound, bound)
        return w, b

    k1, k2, k3 = jax.random.split(key, 3)
    w1, b1 = linear(k1, FEAT, H1)
    w2, b2 = linear(k2, H1, H2)
    w3, b3 = linear(k3, H2, OUT)
    return {"w1": w1, "b1": b1, "w2": w2, "b2": b2, "w3": w3, "b3": b3}


def _reference(x, p):
    h1 = jnp.maximum(x @ p["w1"] + p["b1"], 0.0)
    h2 = jnp.maximum(h1 @ p["w2"] + p["b2"], 0.0)
    return h2 @ p["w3"] + p["b3"]


if __name__ == "__main__":
    key = jax.random.PRNGKey(0)
    kx, kx2, kp = jax.random.split(key, 3)
    params = init_params(kp)

    # Small-batch check (B=2, the module's typical inference case).
    B = 2
    x = jax.random.uniform(kx, (B, FEAT), jnp.float32)
    out = jax.block_until_ready(connect4_outcome_predictor(x, params))
    ref = _reference(x, params)
    assert out.shape == (B, OUT), out.shape
    # bf16 operands / f32 accumulation -> loosened tolerance vs the f32 reference.
    assert jnp.allclose(out, ref, atol=3e-2, rtol=3e-2), "mismatch vs reference (B=2)"

    # Exercise the multi-tile grid and the ragged (non-dividing) final block.
    B2 = 19
    x2 = jax.random.uniform(kx2, (B2, FEAT), jnp.float32)
    out2 = jax.block_until_ready(connect4_outcome_predictor(x2, params, tb=8))
    ref2 = _reference(x2, params)
    assert out2.shape == (B2, OUT), out2.shape
    assert jnp.allclose(out2, ref2, atol=3e-2, rtol=3e-2), "mismatch vs reference (B=19)"

    print("KERNEL_OK")
</pallas_src>

<mosaic_0001>
module attributes {stable_mosaic.version = 11 : i64} {
  func.func @_mlp_kernel(%arg0: i32, %arg1: memref<2x43xf32, #tpu.memory_space<vmem>>, %arg2: memref<43x128xbf16, #tpu.memory_space<vmem>>, %arg3: memref<1x128xf32, #tpu.memory_space<vmem>>, %arg4: memref<128x64xbf16, #tpu.memory_space<vmem>>, %arg5: memref<1x64xf32, #tpu.memory_space<vmem>>, %arg6: memref<64x3xbf16, #tpu.memory_space<vmem>>, %arg7: memref<1x3xf32, #tpu.memory_space<vmem>>, %arg8: memref<2x3xf32, #tpu.memory_space<vmem>>) attributes {dimension_semantics = [#tpu.dimension_semantics<parallel>], iteration_bounds = array<i64: 1>, scalar_prefetch = 0 : i64, scratch_operands = 0 : i64, tpu.core_type = #tpu.core_type<tc>, window_params = [{transform_indices = @transform_0, window_bounds = array<i64: 2, 43>}, {pipeline_mode = #tpu.pipeline_mode<synchronous>, transform_indices = @transform_1, window_bounds = array<i64: 43, 128>}, {pipeline_mode = #tpu.pipeline_mode<synchronous>, transform_indices = @transform_2, window_bounds = array<i64: 1, 128>}, {pipeline_mode = #tpu.pipeline_mode<synchronous>, transform_indices = @transform_3, window_bounds = array<i64: 128, 64>}, {pipeline_mode = #tpu.pipeline_mode<synchronous>, transform_indices = @transform_4, window_bounds = array<i64: 1, 64>}, {pipeline_mode = #tpu.pipeline_mode<synchronous>, transform_indices = @transform_5, window_bounds = array<i64: 64, 3>}, {pipeline_mode = #tpu.pipeline_mode<synchronous>, transform_indices = @transform_6, window_bounds = array<i64: 1, 3>}, {transform_indices = @transform_7, window_bounds = array<i64: 2, 3>}]} {
    %c0 = arith.constant 0 : index
    %c0_0 = arith.constant 0 : index
    %0 = vector.load %arg1[%c0, %c0_0] : memref<2x43xf32, #tpu.memory_space<vmem>>, vector<2x43xf32>
    %1 = arith.truncf %0 : vector<2x43xf32> to vector<2x43xbf16>
    %c0_1 = arith.constant 0 : index
    %c0_2 = arith.constant 0 : index
    %2 = vector.load %arg2[%c0_1, %c0_2] : memref<43x128xbf16, #tpu.memory_space<vmem>>, vector<43x128xbf16>
    %cst = arith.constant dense<0.000000e+00> : vector<2x128xf32>
    %3 = tpu.matmul %1, %2, %cst {dimension_numbers = #tpu.dot_dimension_numbers<[1], [0], [0], [1], [0, 0, 1, 1], [], []>} : vector<2x43xbf16>, vector<43x128xbf16>, vector<2x128xf32> -> vector<2x128xf32>
    %c0_3 = arith.constant 0 : index
    %c0_4 = arith.constant 0 : index
    %4 = vector.load %arg3[%c0_3, %c0_4] : memref<1x128xf32, #tpu.memory_space<vmem>>, vector<1x128xf32>
    %5 = vector.broadcast %4 : vector<1x128xf32> to vector<2x128xf32>
    %6 = arith.addf %3, %5 : vector<2x128xf32>
    %cst_5 = arith.constant 0.000000e+00 : f32
    %7 = vector.broadcast %cst_5 : f32 to vector<2x128xf32>
    %8 = arith.maximumf %6, %7 : vector<2x128xf32>
    %9 = arith.truncf %8 : vector<2x128xf32> to vector<2x128xbf16>
    %c0_6 = arith.constant 0 : index
    %c0_7 = arith.constant 0 : index
    %10 = vector.load %arg4[%c0_6, %c0_7] : memref<128x64xbf16, #tpu.memory_space<vmem>>, vector<128x64xbf16>
    %cst_8 = arith.constant dense<0.000000e+00> : vector<2x64xf32>
    %11 = tpu.matmul %9, %10, %cst_8 {dimension_numbers = #tpu.dot_dimension_numbers<[1], [0], [0], [1], [0, 0, 1, 1], [], []>} : vector<2x128xbf16>, vector<128x64xbf16>, vector<2x64xf32> -> vector<2x64xf32>
    %c0_9 = arith.constant 0 : index
    %c0_10 = arith.constant 0 : index
    %12 = vector.load %arg5[%c0_9, %c0_10] : memref<1x64xf32, #tpu.memory_space<vmem>>, vector<1x64xf32>
    %13 = vector.broadcast %12 : vector<1x64xf32> to vector<2x64xf32>
    %14 = arith.addf %11, %13 : vector<2x64xf32>
    %cst_11 = arith.constant 0.000000e+00 : f32
    %15 = vector.broadcast %cst_11 : f32 to vector<2x64xf32>
    %16 = arith.maximumf %14, %15 : vector<2x64xf32>
    %17 = arith.truncf %16 : vector<2x64xf32> to vector<2x64xbf16>
    %c0_12 = arith.constant 0 : index
    %c0_13 = arith.constant 0 : index
    %18 = vector.load %arg6[%c0_12, %c0_13] : memref<64x3xbf16, #tpu.memory_space<vmem>>, vector<64x3xbf16>
    %cst_14 = arith.constant dense<0.000000e+00> : vector<2x3xf32>
    %19 = tpu.matmul %17, %18, %cst_14 {dimension_numbers = #tpu.dot_dimension_numbers<[1], [0], [0], [1], [0, 0, 1, 1], [], []>} : vector<2x64xbf16>, vector<64x3xbf16>, vector<2x3xf32> -> vector<2x3xf32>
    %c0_15 = arith.constant 0 : index
    %c0_16 = arith.constant 0 : index
    %20 = vector.load %arg7[%c0_15, %c0_16] : memref<1x3xf32, #tpu.memory_space<vmem>>, vector<1x3xf32>
    %21 = vector.broadcast %20 : vector<1x3xf32> to vector<2x3xf32>
    %22 = arith.addf %19, %21 : vector<2x3xf32>
    %c0_17 = arith.constant 0 : index
    %c0_18 = arith.constant 0 : index
    %23 = vector.load %arg8[%c0_17, %c0_18] : memref<2x3xf32, #tpu.memory_space<vmem>>, vector<2x3xf32>
    tpu.vector_store %arg8[%c0_17, %c0_18], %22 {strides = array<i32>} : memref<2x3xf32, #tpu.memory_space<vmem>>, vector<2x3xf32>,
    return
  }
  func.func @transform_0(%arg0: i32) -> (i32, i32) {
    %c0_i32 = arith.constant 0 : i32
    %c0_i32_0 = arith.constant 0 : i32
    return %arg0, %c0_i32 : i32, i32
  }
  func.func @transform_1(%arg0: i32) -> (i32, i32) {
    %c0_i32 = arith.constant 0 : i32
    %c0_i32_0 = arith.constant 0 : i32
    %c0_i32_1 = arith.constant 0 : i32
    return %c0_i32, %c0_i32_0 : i32, i32
  }
  func.func @transform_2(%arg0: i32) -> (i32, i32) {
    %c0_i32 = arith.constant 0 : i32
    %c0_i32_0 = arith.constant 0 : i32
    %c0_i32_1 = arith.constant 0 : i32
    return %c0_i32, %c0_i32_0 : i32, i32
  }
  func.func @transform_3(%arg0: i32) -> (i32, i32) {
    %c0_i32 = arith.constant 0 : i32
    %c0_i32_0 = arith.constant 0 : i32
    %c0_i32_1 = arith.constant 0 : i32
    return %c0_i32, %c0_i32_0 : i32, i32
  }
  func.func @transform_4(%arg0: i32) -> (i32, i32) {
    %c0_i32 = arith.constant 0 : i32
    %c0_i32_0 = arith.constant 0 : i32
    %c0_i32_1 = arith.constant 0 : i32
    return %c0_i32, %c0_i32_0 : i32, i32
  }
  func.func @transform_5(%arg0: i32) -> (i32, i32) {
    %c0_i32 = arith.constant 0 : i32
    %c0_i32_0 = arith.constant 0 : i32
    %c0_i32_1 = arith.constant 0 : i32
    return %c0_i32, %c0_i32_0 : i32, i32
  }
  func.func @transform_6(%arg0: i32) -> (i32, i32) {
    %c0_i32 = arith.constant 0 : i32
    %c0_i32_0 = arith.constant 0 : i32
    %c0_i32_1 = arith.constant 0 : i32
    return %c0_i32, %c0_i32_0 : i32, i32
  }
  func.func @transform_7(%arg0: i32) -> (i32, i32) {
    %c0_i32 = arith.constant 0 : i32
    %c0_i32_0 = arith.constant 0 : i32
    return %arg0, %c0_i32 : i32, i32
  }
}

</mosaic_0001>

<llo_original>
// kernel: connect4_outcome_predictor.1
$region0: #{connect4_outcome_predictor.1}
  #allocation0 [shape = 'u32[]', space=smem, size = 0x4, offset = 0x4, fixed_abs, tag = 'smem constant byte address 0x4 - core index']
  #allocation1 [shape = 'u32[144,128]{1,0:T(1,128)}', space=vmem, size = 0x12000, scoped, tag = 'internal scratch']
  %s0 = inlined_call_operand.vmem [shape: f32[2,43], index: 0, kind: input, shape index: {}]
  %s1 = inlined_call_operand.vmem [shape: bf16[43,128], index: 1, kind: input, shape index: {}]
  %s2 = inlined_call_operand.vmem [shape: f32[1,128], index: 2, kind: input, shape index: {}]
  %s3 = inlined_call_operand.vmem [shape: bf16[128,64], index: 3, kind: input, shape index: {}]
  %s4 = inlined_call_operand.vmem [shape: f32[1,64], index: 4, kind: input, shape index: {}]
  %s5 = inlined_call_operand.vmem [shape: bf16[64,3], index: 5, kind: input, shape index: {}]
  %s6 = inlined_call_operand.vmem [shape: f32[1,3], index: 6, kind: input, shape index: {}]
  %s7 = inlined_call_operand.hbm [shape: f32[2,3], index: 7, kind: output, shape index: {}]
  %s8 = sld [smem:[#allocation0]]
  $region38: #{connect4_outcome_predictor.1} parent=0
    _
  %s10 = ssub.s32 1, %s8
  %s11 = scalar_select 0, %s10, %s8
  $region1: #{connect4_outcome_predictor.1} parent=0
    #allocation2 [shape = 'u8[1024]{0}', space=vmem, size = 0x400, scoped, tag = 'output window, operand 0, single buffered']
    #allocation3 [shape = 's32[1]{0}', space=sflag, size = 0x4, scoped, tag = 'scoped memory for connect4_outcome_predictor.1']
    %12 = vsyncpa [#allocation3], 0
    // Predicated region
    $region2: #{connect4_outcome_predictor.1} parent=1 // pred_check
      _
    $region3: #{connect4_outcome_predictor.1} parent=1 // pred_check_branch
      %14 = sbr.rel (0) target = $region5
    $region4: #{connect4_outcome_predictor.1} parent=1 // pred_region
      _
    $region5: #{connect4_outcome_predictor.1} parent=1 // pred_fallthru
      _
    // Predicated region
    $region6: #{connect4_outcome_predictor.1} parent=1 // pred_check
      _
    $region7: #{connect4_outcome_predictor.1} parent=1 // pred_check_branch
      %16 = sbr.rel (0) target = $region9
    $region8: #{connect4_outcome_predictor.1} parent=1 // pred_region
      _
    $region9: #{connect4_outcome_predictor.1} parent=1 // pred_fallthru
      _
    // Predicated region
    $region10: #{connect4_outcome_predictor.1} parent=1 // pred_check
      _
    $region11: #{connect4_outcome_predictor.1} parent=1 // pred_check_branch
      %18 = sbr.rel (0) target = $region13
    $region12: #{connect4_outcome_predictor.1} parent=1 // pred_region
      _
    $region13: #{connect4_outcome_predictor.1} parent=1 // pred_fallthru
      _
    // Predicated region
    $region14: #{connect4_outcome_predictor.1} parent=1 // pred_check
      _
    $region15: #{connect4_outcome_predictor.1} parent=1 // pred_check_branch
      %20 = sbr.rel (0) target = $region17
    $region16: #{connect4_outcome_predictor.1} parent=1 // pred_region
      _
    $region17: #{connect4_outcome_predictor.1} parent=1 // pred_fallthru
      _
    // Predicated region
    $region18: #{connect4_outcome_predictor.1} parent=1 // pred_check
      _
    $region19: #{connect4_outcome_predictor.1} parent=1 // pred_check_branch
      %22 = sbr.rel (0) target = $region21
    $region20: #{connect4_outcome_predictor.1} parent=1 // pred_region
      _
    $region21: #{connect4_outcome_predictor.1} parent=1 // pred_fallthru
      _
    // Predicated region
    $region22: #{connect4_outcome_predictor.1} parent=1 // pred_check
      _
    $region23: #{connect4_outcome_predictor.1} parent=1 // pred_check_branch
      %24 = sbr.rel (0) target = $region25
    $region24: #{connect4_outcome_predictor.1} parent=1 // pred_region
      _
    $region25: #{connect4_outcome_predictor.1} parent=1 // pred_fallthru
      _
    // Predicated region
    $region26: #{connect4_outcome_predictor.1} parent=1 // pred_check
      _
    $region27: #{connect4_outcome_predictor.1} parent=1 // pred_check_branch
      %26 = sbr.rel (0) target = $region29
    $region28: #{connect4_outcome_predictor.1} parent=1 // pred_region
      _
    $region29: #{connect4_outcome_predictor.1} parent=1 // pred_fallthru
      _
    %v28 = vld [vmem:[%s0] sm:$0x3]
    %v29 = vpack.c.bf16 %v28, %v28
    %v30 = vld [vmem:[%s1] sm:$0xf]
    %v31 = vld [vmem:[%s1 + $0x4] sm:$0xf]
    %v32 = vld [vmem:[%s1 + $0x8] sm:$0xf]
    %v33 = vld [vmem:[%s1 + $0xc] sm:$0xf]
    %v34 = vld [vmem:[%s1 + $0x10] sm:$0xf]
    %v35 = vld [vmem:[%s1 + $0x14] sm:$0x3]
    %v36 = vld [vmem:[%s2] sm:$0x1]
    %v38 = vlaneseq
    %v39 = vshrl.u32 %v38, 7
    %v40 = vsub.s32 0, %v39
    %v41 = vrot.slane %v36, %v40
    %v49 = vunpack.c.l.b16 %v30
    %v50 = vunpack.c.l.b16 %v31
    %v51 = vunpack.c.l.b16 %v32
    %v52 = vunpack.c.l.b16 %v33
    %v53 = vunpack.c.l.b16 %v34
    %v54 = vunpack.c.l.b16 %v35
    %v55 = vpack.c.b16 %v50, %v49
    %v56 = vpack.c.b16 %v52, %v51
    %v57 = vpack.c.b16 %v54, %v53
    %vm60 = vcmask 351232
    %v62 = vsel %vm60, %v29, 0
    %vm64 = vcmask 1044480
    %vm65 = vcmask 1045504
    %v66 = vsel %vm64, 4294967295, 65535
    %v67 = vsel %vm65, %v66, 0
    %v69 = vand.u32 %v57, %v67
    %71 = vmatprep.subr.bf16.mxu0 0
    %72 = vmatpush1.bf16.msra.mxu0 0
    %73 = vmatprep.subr.bf16.mxu0 0
    %74 = vmatpush1.bf16.msra.mxu0 0
    %75 = vmatprep.subr.bf16.mxu0 0
    %76 = vmatpush1.bf16.msra.mxu0 0
    %77 = vmatprep.subr.bf16.mxu0 0
    %78 = vmatpush1.bf16.msra.mxu0 0
    %79 = vmatprep.subr.bf16.mxu0 0
    %80 = vmatpush1.bf16.msra.mxu0 0
    %81 = vmatprep.subr.bf16.mxu0 0
    %82 = vmatpush1.bf16.msra.mxu0 %v69
    %83 = vmatprep.subr.bf16.mxu0 0
    %84 = vmatpush1.bf16.msra.mxu0 %v56
    %85 = vmatprep.subr.bf16.mxu0 0
    %86 = vmatpush1.bf16.msra.mxu0 %v55
    %87 = vmatprep.subr.bf16.mxu0 0
    %88 = vmatpush2.bf16.msra.mxu0 0
    %89 = vmatprep.subr.bf16.mxu0 0
    %90 = vmatpush2.bf16.msra.mxu0 0
    %91 = vmatprep.subr.bf16.mxu0 0
    %92 = vmatpush2.bf16.msra.mxu0 0
    %93 = vmatprep.subr.bf16.mxu0 0
    %94 = vmatpush2.bf16.msra.mxu0 0
    %95 = vmatprep.subr.bf16.mxu0 0
    %96 = vmatpush2.bf16.msra.mxu0 0
    %97 = vmatprep.subr.bf16.mxu0 0
    %98 = vmatpush2.bf16.msra.mxu0 0
    %99 = vmatprep.subr.bf16.mxu0 0
    %100 = vmatpush2.bf16.msra.mxu0 0
    %101 = vmatprep.subr.bf16.mxu0 0
    %102 = vmatpush2.bf16.msra.mxu0 0
    %103 = vmatprep.mubr.bf16.mxu0 0
    %104 = vmatmul.mubr.bf16.gmra.mxu0 %v62
    %v105 = vpop.f32.mrf.mxu0
    %v106 = vadd.f32 %v41, %v105
    %v107 = vpop.f32.mrf.mxu0
    %v108 = vpop.f32.mrf.mxu0
    %v109 = vpop.f32.mrf.mxu0
    %110 = vdwg.mxu0
    %v111 = vmax.f32 %v106, 0.0
    %v112 = vpack.c.bf16 %v111, %v111
    %v113 = vld [vmem:[%s3] sm:$0xf]
    %v114 = vld [vmem:[%s3 + $0x4] sm:$0xf]
    %v115 = vld [vmem:[%s3 + $0x8] sm:$0xf]
    %v116 = vld [vmem:[%s3 + $0xc] sm:$0xf]
    %v117 = vld [vmem:[%s3 + $0x10] sm:$0xf]
    %v118 = vld [vmem:[%s3 + $0x14] sm:$0xf]
    %v119 = vld [vmem:[%s3 + $0x18] sm:$0xf]
    %v120 = vld [vmem:[%s3 + $0x1c] sm:$0xf]
    %v121 = vld [vmem:[%s3 + $0x20] sm:$0xf]
    %v122 = vld [vmem:[%s3 + $0x24] sm:$0xf]
    %v123 = vld [vmem:[%s3 + $0x28] sm:$0xf]
    %v124 = vld [vmem:[%s3 + $0x2c] sm:$0xf]
    %v125 = vld [vmem:[%s3 + $0x30] sm:$0xf]
    %v126 = vld [vmem:[%s3 + $0x34] sm:$0xf]
    %v127 = vld [vmem:[%s3 + $0x38] sm:$0xf]
    %v128 = vld [vmem:[%s3 + $0x3c] sm:$0xf]
    %v129 = vld [vmem:[%s4] sm:$0x1]
    %v131 = vlaneseq
    %v132 = vshrl.u32 %v131, 7
    %v133 = vsub.s32 0, %v132
    %v134 = vrot.slane %v129, %v133
    %v152 = vunpack.c.l.b16 %v113
    %v153 = vunpack.c.l.b16 %v114
    %v154 = vunpack.c.l.b16 %v115
    %v155 = vunpack.c.l.b16 %v116
    %v156 = vunpack.c.l.b16 %v117
    %v157 = vunpack.c.l.b16 %v118
    %v158 = vunpack.c.l.b16 %v119
    %v159 = vunpack.c.l.b16 %v120
    %v160 = vunpack.c.l.b16 %v121
    %v161 = vunpack.c.l.b16 %v122
    %v162 = vunpack.c.l.b16 %v123
    %v163 = vunpack.c.l.b16 %v124
    %v164 = vunpack.c.l.b16 %v125
    %v165 = vunpack.c.l.b16 %v126
    %v166 = vunpack.c.l.b16 %v127
    %v167 = vunpack.c.l.b16 %v128
    %v168 = vpack.c.b16 %v153, %v152
    %v169 = vpack.c.b16 %v155, %v154
    %v170 = vpack.c.b16 %v157, %v156
    %v171 = vpack.c.b16 %v159, %v158
    %v172 = vpack.c.b16 %v161, %v160
    %v173 = vpack.c.b16 %v163, %v162
    %v174 = vpack.c.b16 %v165, %v164
    %v175 = vpack.c.b16 %v167, %v166
    %184 = vmatprep.subr.bf16.mxu0 0
    %185 = vmatpush1.bf16.msra.mxu0 %v175
    %186 = vmatprep.subr.bf16.mxu0 0
    %187 = vmatpush1.bf16.msra.mxu0 %v174
    %188 = vmatprep.subr.bf16.mxu0 0
    %189 = vmatpush1.bf16.msra.mxu0 %v173
    %190 = vmatprep.subr.bf16.mxu0 0
    %191 = vmatpush1.bf16.msra.mxu0 %v172
    %192 = vmatprep.subr.bf16.mxu0 0
    %193 = vmatpush1.bf16.msra.mxu0 %v171
    %194 = vmatprep.subr.bf16.mxu0 0
    %195 = vmatpush1.bf16.msra.mxu0 %v170
    %196 = vmatprep.subr.bf16.mxu0 0
    %197 = vmatpush1.bf16.msra.mxu0 %v169
    %198 = vmatprep.subr.bf16.mxu0 0
    %199 = vmatpush1.bf16.msra.mxu0 %v168
    %200 = vmatprep.subr.bf16.mxu0 0
    %201 = vmatpush2.bf16.msra.mxu0 0
    %202 = vmatprep.subr.bf16.mxu0 0
    %203 = vmatpush2.bf16.msra.mxu0 0
    %204 = vmatprep.subr.bf16.mxu0 0
    %205 = vmatpush2.bf16.msra.mxu0 0
    %206 = vmatprep.subr.bf16.mxu0 0
    %207 = vmatpush2.bf16.msra.mxu0 0
    %208 = vmatprep.subr.bf16.mxu0 0
    %209 = vmatpush2.bf16.msra.mxu0 0
    %210 = vmatprep.subr.bf16.mxu0 0
    %211 = vmatpush2.bf16.msra.mxu0 0
    %212 = vmatprep.subr.bf16.mxu0 0
    %213 = vmatpush2.bf16.msra.mxu0 0
    %214 = vmatprep.subr.bf16.mxu0 0
    %215 = vmatpush2.bf16.msra.mxu0 0
    %216 = vmatprep.mubr.bf16.mxu0 0
    %217 = vmatmul.mubr.bf16.gmra.mxu0 %v112
    %v218 = vpop.f32.mrf.mxu0
    %v219 = vadd.f32 %v134, %v218
    %v220 = vpop.f32.mrf.mxu0
    %v221 = vpop.f32.mrf.mxu0
    %v222 = vpop.f32.mrf.mxu0
    %223 = vdwg.mxu0
    %v224 = vmax.f32 %v219, 0.0
    %v225 = vpack.c.bf16 %v224, %v224
    %v226 = vld [vmem:[%s5] sm:$0xf]
    %v227 = vld [vmem:[%s5 + $0x4] sm:$0xf]
    %v228 = vld [vmem:[%s5 + $0x8] sm:$0xf]
    %v229 = vld [vmem:[%s5 + $0xc] sm:$0xf]
    %v230 = vld [vmem:[%s5 + $0x10] sm:$0xf]
    %v231 = vld [vmem:[%s5 + $0x14] sm:$0xf]
    %v232 = vld [vmem:[%s5 + $0x18] sm:$0xf]
    %v233 = vld [vmem:[%s5 + $0x1c] sm:$0xf]
    %v234 = vld [vmem:[%s6] sm:$0x1]
    %v236 = vlaneseq
    %v237 = vshrl.u32 %v236, 7
    %v238 = vsub.s32 0, %v237
    %v239 = vrot.slane %v234, %v238
    %v249 = vunpack.c.l.b16 %v226
    %v250 = vunpack.c.l.b16 %v227
    %v251 = vunpack.c.l.b16 %v228
    %v252 = vunpack.c.l.b16 %v229
    %v253 = vunpack.c.l.b16 %v230
    %v254 = vunpack.c.l.b16 %v231
    %v255 = vunpack.c.l.b16 %v232
    %v256 = vunpack.c.l.b16 %v233
    %v257 = vpack.c.b16 %v250, %v249
    %v258 = vpack.c.b16 %v252, %v251
    %v259 = vpack.c.b16 %v254, %v253
    %v260 = vpack.c.b16 %v256, %v255
    %vm265 = vcmask 523264
    %v267 = vsel %vm265, %v225, 0
    %269 = vmatprep.subr.bf16.mxu0 0
    %270 = vmatpush1.bf16.msra.mxu0 0
    %271 = vmatprep.subr.bf16.mxu0 0
    %272 = vmatpush1.bf16.msra.mxu0 0
    %273 = vmatprep.subr.bf16.mxu0 0
    %274 = vmatpush1.bf16.msra.mxu0 0
    %275 = vmatprep.subr.bf16.mxu0 0
    %276 = vmatpush1.bf16.msra.mxu0 0
    %277 = vmatprep.subr.bf16.mxu0 0
    %278 = vmatpush1.bf16.msra.mxu0 %v260
    %279 = vmatprep.subr.bf16.mxu0 0
    %280 = vmatpush1.bf16.msra.mxu0 %v259
    %281 = vmatprep.subr.bf16.mxu0 0
    %282 = vmatpush1.bf16.msra.mxu0 %v258
    %283 = vmatprep.subr.bf16.mxu0 0
    %284 = vmatpush1.bf16.msra.mxu0 %v257
    %285 = vmatprep.subr.bf16.mxu0 0
    %286 = vmatpush2.bf16.msra.mxu0 0
    %287 = vmatprep.subr.bf16.mxu0 0
    %288 = vmatpush2.bf16.msra.mxu0 0
    %289 = vmatprep.subr.bf16.mxu0 0
    %290 = vmatpush2.bf16.msra.mxu0 0
    %291 = vmatprep.subr.bf16.mxu0 0
    %292 = vmatpush2.bf16.msra.mxu0 0
    %293 = vmatprep.subr.bf16.mxu0 0
    %294 = vmatpush2.bf16.msra.mxu0 0
    %295 = vmatprep.subr.bf16.mxu0 0
    %296 = vmatpush2.bf16.msra.mxu0 0
    %297 = vmatprep.subr.bf16.mxu0 0
    %298 = vmatpush2.bf16.msra.mxu0 0
    %299 = vmatprep.subr.bf16.mxu0 0
    %300 = vmatpush2.bf16.msra.mxu0 0
    %301 = vmatprep.mubr.bf16.mxu0 0
    %302 = vmatmul.mubr.bf16.gmra.mxu0 %v267
    %v303 = vpop.f32.mrf.mxu0
    %v304 = vadd.f32 %v239, %v303
    %v305 = vpop.f32.mrf.mxu0
    %v306 = vpop.f32.mrf.mxu0
    %v307 = vpop.f32.mrf.mxu0
    %308 = vdwg.mxu0
    %vm309 = vcmask 17408
    %310 = vst.msk [vmem:[#allocation2] sm:$0x3] %vm309, %v304
    // Predicated region
    $region30: #{connect4_outcome_predictor.1} parent=1 // pred_check
      _
    $region31: #{connect4_outcome_predictor.1} parent=1 // pred_check_branch
      %312 = sbr.rel (0) target = $region33
    $region32: #{connect4_outcome_predictor.1} parent=1 // pred_region
      %s314 = ssub.s32 32, 32
      %315 = vsyncadd [#allocation3], %s314
      %s317 = sshll.u32 [#allocation2], 4
      %s318 = int_to_ptr.vmem [resolvable:$true] %s317
      %320 = dma.vmem_to_hbm [thread:$0]  %s318, 32, %s7, [#allocation3]
    $region33: #{connect4_outcome_predictor.1} parent=1 // pred_fallthru
      _
    // Predicated region
    $region34: #{connect4_outcome_predictor.1} parent=1 // pred_check
      _
    $region35: #{connect4_outcome_predictor.1} parent=1 // pred_check_branch
      %322 = sbr.rel (0) target = $region37
    $region36: #{connect4_outcome_predictor.1} parent=1 // pred_region
      %323 = dma.done [#allocation3], 32
    $region37: #{connect4_outcome_predictor.1} parent=1 // pred_fallthru
      _
    %324 = vsyncpa [#allocation3], 1

</llo_original>
